<compile_context>
chip_gen: v7x
topology: tpu7x:2x2x1
jax: 0.10.0
libtpu: 0.0.40
codegen_flags: <defaults>
</compile_context>

<pallas_src>
import functools

import jax
import jax.numpy as jnp
from jax import lax
from jax.experimental import pallas as pl
from jax.experimental.pallas import tpu as pltpu

_MASK_VALUE = -1e30            # applied to f32 scores only => bf16-input safe
_VMEM_LIMIT = 64 * 1024 * 1024  # explicit scoped-VMEM budget (<= v7x physical)


def _tile(dim: int, preferred: int, quantum: int) -> int:
    """Largest divisor of `dim` that is a multiple of `quantum` and <= `preferred`.

    Falls back to the full dimension (always layout-legal) only if no such
    divisor exists, so non-divisible shapes never silently explode VMEM with
    a huge block unless unavoidable.
    """
    if preferred >= dim:
        return dim
    t = (preferred // quantum) * quantum
    while t >= quantum:
        if dim % t == 0:
            return t
        t -= quantum
    return dim


# ------------------------- tiled projection matmul ------------------------- #
def _matmul_kernel(x_ref, w_ref, o_ref, acc_ref):
    @pl.when(pl.program_id(2) == 0)
    def _init():
        acc_ref[...] = jnp.zeros_like(acc_ref)

    acc_ref[...] += jnp.dot(x_ref[...], w_ref[...],
                            preferred_element_type=jnp.float32)

    @pl.when(pl.program_id(2) == pl.num_programs(2) - 1)
    def _finalize():
        o_ref[...] = acc_ref[...].astype(o_ref.dtype)


def pallas_matmul(x, w, *, tm=512, tn=512, tk=512):
    """x @ w, tiled over (M, N, K) with an f32 VMEM accumulator on the K axis."""
    m, k = x.shape
    k2, n = w.shape
    assert k == k2
    tm = _tile(m, tm, 8)      # sublane axis
    tn = _tile(n, tn, 128)    # lane axis
    tk = _tile(k, tk, 128)    # lane of x / sublane of w
    grid = (m // tm, n // tn, k // tk)
    cost = pl.CostEstimate(
        flops=2 * m * n * k,
        transcendentals=0,
        bytes_accessed=int((m * k + k * n + m * n) * x.dtype.itemsize))
    return pl.pallas_call(
        _matmul_kernel,
        out_shape=jax.ShapeDtypeStruct((m, n), x.dtype),
        grid_spec=pltpu.PrefetchScalarGridSpec(
            num_scalar_prefetch=0,
            grid=grid,
            in_specs=[pl.BlockSpec((tm, tk), lambda i, j, kk: (i, kk)),
                      pl.BlockSpec((tk, tn), lambda i, j, kk: (kk, j))],
            out_specs=pl.BlockSpec((tm, tn), lambda i, j, kk: (i, j)),
            scratch_shapes=[pltpu.VMEM((tm, tn), jnp.float32)]),
        compiler_params=pltpu.CompilerParams(
            dimension_semantics=("parallel", "parallel", "arbitrary"),
            vmem_limit_bytes=_VMEM_LIMIT),
        cost_estimate=cost,
    )(x, w)


# ------------------------------ rotary kernel ------------------------------ #
def _rope_kernel(x_ref, cos_ref, sin_ref, o_ref, *, half):
    x = x_ref[...]                                 # (tt, D), activation dtype
    # neox rotate_half via XLU lane rotation: roll(x, half) = [x2, x1]; the
    # sin table is sign-folded host-side to [-sin, +sin], so
    # x*cos + roll(x)*sin_signed == [x1*c - x2*s, x2*c + x1*s].
    rot = pltpu.roll(x, shift=half, axis=1)
    o_ref[...] = (x * cos_ref[...] + rot * sin_ref[...]).astype(o_ref.dtype)


def pallas_rope(qkv, cos, sin_signed, *, num_heads, num_kv_heads, head_dim,
                tt=512):
    """Apply RoPE to the q and k column blocks of the token-major qkv matrix.

    Returns qk_rot of shape [T, (num_heads + num_kv_heads) * head_dim]; each
    (q or k) head is rotated exactly once (GQA-aware: no per-q-head K rework).
    Grid is (token_tile, head) with head innermost so the cos/sin tiles are
    only DMA'd once per token tile (their block index is constant inside the
    inner loop and Pallas skips the re-copy).
    """
    t = qkv.shape[0]
    d = head_dim
    n_rot = num_heads + num_kv_heads
    tt = _tile(t, tt, 8)
    cost = pl.CostEstimate(
        flops=4 * t * n_rot * d,
        transcendentals=0,
        bytes_accessed=int((2 * t * n_rot * d + 2 * t * d)
                           * qkv.dtype.itemsize))
    return pl.pallas_call(
        functools.partial(_rope_kernel, half=d // 2),
        out_shape=jax.ShapeDtypeStruct((t, n_rot * d), qkv.dtype),
        grid_spec=pltpu.PrefetchScalarGridSpec(
            num_scalar_prefetch=0,
            grid=(t // tt, n_rot),
            in_specs=[pl.BlockSpec((tt, d), lambda ti, h: (ti, h)),
                      pl.BlockSpec((tt, d), lambda ti, h: (ti, 0)),
                      pl.BlockSpec((tt, d), lambda ti, h: (ti, 0))],
            out_specs=pl.BlockSpec((tt, d), lambda ti, h: (ti, h))),
        compiler_params=pltpu.CompilerParams(
            dimension_semantics=("parallel", "parallel")),
        cost_estimate=cost,
    )(qkv, cos, sin_signed)


# ---------------------- causal GQA flash attention ------------------------- #
def _flash_attn_kernel(q_ref, k_ref, v_ref, o_ref,
                       q_scr, m_scr, l_scr, acc_scr,
                       *, scaling, group, head_dim, tq, tk):
    qi = pl.program_id(1)
    ki = pl.program_id(2)
    q_start = qi * tq
    k_start = ki * tk
    d = head_dim

    @pl.when(ki == 0)
    def _init():
        # Fold the softmax scaling into Q once per (kv-head, q-tile) instead of
        # multiplying every (tq, tk) f32 score tile in the inner KV loop.
        q_scr[...] = (q_ref[...].astype(jnp.float32) * scaling
                      ).astype(q_scr.dtype)
        # -1e30 (not -inf): every row sees >= 1 unmasked key in the ki==0 tile
        # under the causal structure, so stats are always finite at finalize.
        m_scr[...] = jnp.full_like(m_scr, _MASK_VALUE)
        l_scr[...] = jnp.zeros_like(l_scr)
        acc_scr[...] = jnp.zeros_like(acc_scr)

    # Causal tiling structure:
    #   visible -> tile contains at least one key visible to some query row
    #   on_diag -> tile straddles the diagonal and needs the mask
    # Fully-masked (future) KV tiles: compute skipped here AND the DMA skipped
    # via the clamped k/v index maps in the wrapper.
    visible = k_start <= q_start + (tq - 1)
    on_diag = (k_start + (tk - 1)) > q_start

    def _update(apply_mask):
        k = k_ref[...]                                     # (tk, D)
        v = v_ref[...]                                     # (tk, D)
        if apply_mask:
            row = lax.broadcasted_iota(jnp.int32, (tq, tk), 0) + q_start
            col = lax.broadcasted_iota(jnp.int32, (tq, tk), 1) + k_start
            causal = col <= row
        for g in range(group):                             # GQA group folded in
            q = q_scr[:, g * d:(g + 1) * d]                # (tq, D), pre-scaled
            s = lax.dot_general(q, k, (((1,), (1,)), ((), ())),
                                preferred_element_type=jnp.float32)
            if apply_mask:
                s = jnp.where(causal, s, _MASK_VALUE)
            m_prev = m_scr[g]                              # (tq, 128) lane-dense
            l_prev = l_scr[g]
            m_new = jnp.maximum(m_prev, jnp.max(s, axis=-1, keepdims=True))
            alpha = jnp.exp(m_prev - m_new)
            p = jnp.exp(s - m_new[:, :1])
            l_scr[g] = alpha * l_prev + jnp.sum(p, axis=-1, keepdims=True)
            acc_scr[g] = (alpha[:, :1] * acc_scr[g]
                          + jnp.dot(p.astype(v.dtype), v,
                                    preferred_element_type=jnp.float32))
            m_scr[g] = m_new

    @pl.when(jnp.logical_and(visible, on_diag))
    def _diag_tile():
        _update(apply_mask=True)

    @pl.when(jnp.logical_and(visible, jnp.logical_not(on_diag)))
    def _past_tile():
        _update(apply_mask=False)

    @pl.when(ki == pl.num_programs(2) - 1)
    def _finalize():
        for g in range(group):
            inv_l = pl.reciprocal(l_scr[g], approx=True)   # EUP vrcp slot
            o_ref[:, g * d:(g + 1) * d] = (
                acc_scr[g] * inv_l[:, :1]).astype(o_ref.dtype)


def pallas_flash_attention(qk_rot, qkv, *, num_heads, num_kv_heads, head_dim,
                           scaling, tq=512, tk=512):
    """Causal GQA flash attention, group folded into the kernel.

    Q is a (tq, group*head_dim) column block of qk_rot [T, (nH+nKV)*D]; K is a
    column block of qk_rot; V is a column block of qkv [T, (nH+2nKV)*D].
    Output is the token-major, lane-dense [T, nH*D] slab.  Grid =
    (kv_head, q_tile, kv_tile) with the KV reduction axis last, so K/V stream
    from HBM once per kv head (not once per q head), and future KV tiles are
    never fetched (clamped index maps => block index repeats => copy elided).
    """
    t = qkv.shape[0]
    d = head_dim
    assert num_heads % num_kv_heads == 0
    group = num_heads // num_kv_heads
    tq = _tile(t, tq, 8)
    tk = _tile(t, tk, 8)
    grid = (num_kv_heads, t // tq, t // tk)

    def q_map(kvh, qi, ki):
        return (qi, kvh)                       # group's q heads are contiguous

    def k_map(kvh, qi, ki):
        ki_eff = jnp.minimum(ki, (qi * tq + tq - 1) // tk)   # DMA-skip future
        return (ki_eff, num_heads + kvh)

    def v_map(kvh, qi, ki):
        ki_eff = jnp.minimum(ki, (qi * tq + tq - 1) // tk)
        return (ki_eff, num_heads + num_kv_heads + kvh)

    def o_map(kvh, qi, ki):
        return (qi, kvh)

    kv_resweeps = max(1, (t // tq + 1) // 2)   # causal-averaged q-tile passes
    cost = pl.CostEstimate(
        flops=int(2 * num_heads * t * t * d),              # 2 matmuls, /2 causal
        transcendentals=int(num_heads * t * t // 2),
        bytes_accessed=int((2 * t * num_heads * d
                            + 2 * t * num_kv_heads * d * kv_resweeps)
                           * qkv.dtype.itemsize))
    return pl.pallas_call(
        functools.partial(_flash_attn_kernel, scaling=scaling, group=group,
                          head_dim=d, tq=tq, tk=tk),
        out_shape=jax.ShapeDtypeStruct((t, num_heads * d), qkv.dtype),
        grid_spec=pltpu.PrefetchScalarGridSpec(
            num_scalar_prefetch=0,
            grid=grid,
            in_specs=[pl.BlockSpec((tq, group * d), q_map),
                      pl.BlockSpec((tk, d), k_map),
                      pl.BlockSpec((tk, d), v_map)],
            out_specs=pl.BlockSpec((tq, group * d), o_map),
            scratch_shapes=[
                pltpu.VMEM((tq, group * d), qkv.dtype),      # pre-scaled Q
                pltpu.VMEM((group, tq, 128), jnp.float32),   # running max (lane-dense)
                pltpu.VMEM((group, tq, 128), jnp.float32),   # running sum (lane-dense)
                pltpu.VMEM((group, tq, d), jnp.float32),     # output accumulator
            ]),
        compiler_params=pltpu.CompilerParams(
            dimension_semantics=("parallel", "parallel", "arbitrary"),
            vmem_limit_bytes=_VMEM_LIMIT),
        cost_estimate=cost,
    )(qk_rot, qk_rot, qkv)


# ------------------------------ full forward ------------------------------- #
def llama_attention_forward(positions, hidden_states, w_qkv, w_o, *,
                            num_heads, num_kv_heads, head_dim,
                            rope_theta=10000.0, tq=512, tk=512):
    scaling = head_dim ** -0.5

    # 1) QKV projection                                  [T, (nH + 2nKV) * D]
    qkv = pallas_matmul(hidden_states, w_qkv)

    # 2) neox-style rotary tables ([T, D], activation dtype, sign-folded sin)
    inv_freq = 1.0 / (rope_theta ** (
        jnp.arange(0, head_dim, 2, dtype=jnp.float32) / head_dim))
    freqs = positions.astype(jnp.float32)[:, None] * inv_freq[None, :]
    cos = jnp.concatenate([jnp.cos(freqs), jnp.cos(freqs)], axis=-1)
    sin_signed = jnp.concatenate([-jnp.sin(freqs), jnp.sin(freqs)], axis=-1)
    cos = cos.astype(qkv.dtype)
    sin_signed = sin_signed.astype(qkv.dtype)
    qk_rot = pallas_rope(qkv, cos, sin_signed, num_heads=num_heads,
                         num_kv_heads=num_kv_heads, head_dim=head_dim)

    # 3) causal GQA flash attention, token-major output  [T, nH * D]
    attn = pallas_flash_attention(qk_rot, qkv, num_heads=num_heads,
                                  num_kv_heads=num_kv_heads, head_dim=head_dim,
                                  scaling=scaling, tq=tq, tk=tk)

    # 4) output projection                               [T, H]
    # TODO(synk): RowParallelLinear all-reduce omitted (tp_size=1).
    return pallas_matmul(attn, w_o)


# -------------------------------- reference -------------------------------- #
def _reference(positions, x, w_qkv, w_o, *, num_heads, num_kv_heads, head_dim,
               rope_theta=10000.0):
    t, _ = x.shape
    q_size = num_heads * head_dim
    kv_size = num_kv_heads * head_dim
    scaling = head_dim ** -0.5
    qkv = x @ w_qkv
    q = qkv[:, :q_size].reshape(t, num_heads, head_dim)
    k = qkv[:, q_size:q_size + kv_size].reshape(t, num_kv_heads, head_dim)
    v = qkv[:, q_size + kv_size:].reshape(t, num_kv_heads, head_dim)

    half = head_dim // 2
    inv_freq = 1.0 / (rope_theta ** (
        jnp.arange(0, head_dim, 2, dtype=jnp.float32) / head_dim))
    freqs = positions.astype(jnp.float32)[:, None] * inv_freq[None, :]
    cos = jnp.concatenate([jnp.cos(freqs), jnp.cos(freqs)], -1)[:, None, :]
    sin = jnp.concatenate([jnp.sin(freqs), jnp.sin(freqs)], -1)[:, None, :]

    def rot_half(a):
        return jnp.concatenate([-a[..., half:], a[..., :half]], -1)

    q = q * cos + rot_half(q) * sin
    k = k * cos + rot_half(k) * sin

    group = num_heads // num_kv_heads
    k = jnp.repeat(k, group, axis=1)
    v = jnp.repeat(v, group, axis=1)

    s = jnp.einsum("qhd,khd->hqk", q, k) * scaling
    mask = jnp.tril(jnp.ones((t, t), bool))
    s = jnp.where(mask[None], s, -1e30)
    p = jax.nn.softmax(s, axis=-1)
    o = jnp.einsum("hqk,khd->qhd", p, v).reshape(t, num_heads * head_dim)
    return o @ w_o


# ---------------------------------- main ------------------------------------ #
if __name__ == "__main__":
    # Small but layout-realistic shapes: head_dim = 128 keeps every block
    # lane-dense; tq = tk = 8 makes the demo exercise the multi-tile causal /
    # online-softmax / DMA-clamping / group-folding paths
    # (grid = (2 kv heads, 2 q tiles, 2 kv tiles), group = 2).
    hidden_size = 512
    num_heads = 4
    num_kv_heads = 2
    head_dim = hidden_size // num_heads      # 128
    seq_len = 16

    key = jax.random.PRNGKey(0)
    k1, k2, k3 = jax.random.split(key, 3)
    hidden_states = jax.random.normal(k1, (seq_len, hidden_size), jnp.float32)
    w_qkv = jax.random.normal(
        k2, (hidden_size, (num_heads + 2 * num_kv_heads) * head_dim),
        jnp.float32) * 0.05
    w_o = jax.random.normal(
        k3, (num_heads * head_dim, hidden_size), jnp.float32) * 0.05
    positions = jnp.arange(seq_len, dtype=jnp.int32)

    out = llama_attention_forward(
        positions, hidden_states, w_qkv, w_o,
        num_heads=num_heads, num_kv_heads=num_kv_heads, head_dim=head_dim,
        rope_theta=10000.0, tq=8, tk=8)
    out = jax.block_until_ready(out)

    with jax.default_matmul_precision("float32"):
        ref = _reference(
            positions, hidden_states, w_qkv, w_o,
            num_heads=num_heads, num_kv_heads=num_kv_heads, head_dim=head_dim,
            rope_theta=10000.0)
        ref = jax.block_until_ready(ref)

    assert out.shape == (seq_len, hidden_size)
    max_err = float(jnp.max(jnp.abs(out - ref)))
    # Tolerance covers reduced-precision matmul paths the backend may pick for
    # the kernel's dots and the approx (EUP) reciprocal; f32 end-to-end lands
    # well inside it.
    assert jnp.allclose(out, ref, atol=2e-2, rtol=2e-2), (
        f"mismatch vs reference (max abs err {max_err})")
    print("KERNEL_OK")
</pallas_src>

<mosaic_0001>
module attributes {stable_mosaic.version = 11 : i64} {
  func.func @_matmul_kernel(%arg0: i32, %arg1: i32, %arg2: i32, %arg3: memref<16x512xf32, #tpu.memory_space<vmem>>, %arg4: memref<512x512xf32, #tpu.memory_space<vmem>>, %arg5: memref<16x512xf32, #tpu.memory_space<vmem>>, %arg6: memref<16x512xf32, #tpu.memory_space<vmem>>) attributes {dimension_semantics = [#tpu.dimension_semantics<parallel>, #tpu.dimension_semantics<parallel>, #tpu.dimension_semantics<arbitrary>], iteration_bounds = array<i64: 1, 2, 1>, scalar_prefetch = 0 : i64, scratch_operands = 1 : i64, tpu.core_type = #tpu.core_type<tc>, window_params = [{transform_indices = @transform_0, window_bounds = array<i64: 16, 512>}, {transform_indices = @transform_1, window_bounds = array<i64: 512, 512>}, {transform_indices = @transform_2, window_bounds = array<i64: 16, 512>}]} {
    %c0_i32 = arith.constant 0 : i32
    %0 = arith.cmpi eq, %arg2, %c0_i32 : i32
    %1 = arith.extui %0 : i1 to i32
    %c0_i32_0 = arith.constant 0 : i32
    %2 = arith.cmpi ne, %1, %c0_i32_0 : i32
    scf.if %2 {
      %cst_10 = arith.constant 0.000000e+00 : f32
      %12 = vector.broadcast %cst_10 : f32 to vector<16x512xf32>
      %c0_11 = arith.constant 0 : index
      %c0_12 = arith.constant 0 : index
      %13 = vector.load %arg6[%c0_11, %c0_12] : memref<16x512xf32, #tpu.memory_space<vmem>>, vector<16x512xf32>
      tpu.vector_store %arg6[%c0_11, %c0_12], %12 {strides = array<i32>} : memref<16x512xf32, #tpu.memory_space<vmem>>, vector<16x512xf32>,
    } else {
    }
    %c0 = arith.constant 0 : index
    %c0_1 = arith.constant 0 : index
    %3 = vector.load %arg6[%c0, %c0_1] : memref<16x512xf32, #tpu.memory_space<vmem>>, vector<16x512xf32>
    %c0_2 = arith.constant 0 : index
    %c0_3 = arith.constant 0 : index
    %4 = vector.load %arg3[%c0_2, %c0_3] : memref<16x512xf32, #tpu.memory_space<vmem>>, vector<16x512xf32>
    %c0_4 = arith.constant 0 : index
    %c0_5 = arith.constant 0 : index
    %5 = vector.load %arg4[%c0_4, %c0_5] : memref<512x512xf32, #tpu.memory_space<vmem>>, vector<512x512xf32>
    %cst = arith.constant dense<0.000000e+00> : vector<16x512xf32>
    %6 = tpu.matmul %4, %5, %cst {dimension_numbers = #tpu.dot_dimension_numbers<[1], [0], [0], [1], [0, 0, 1, 1], [], []>} : vector<16x512xf32>, vector<512x512xf32>, vector<16x512xf32> -> vector<16x512xf32>
    %7 = arith.addf %3, %6 : vector<16x512xf32>
    %c0_6 = arith.constant 0 : index
    %c0_7 = arith.constant 0 : index
    %8 = vector.load %arg6[%c0_6, %c0_7] : memref<16x512xf32, #tpu.memory_space<vmem>>, vector<16x512xf32>
    tpu.vector_store %arg6[%c0_6, %c0_7], %7 {strides = array<i32>} : memref<16x512xf32, #tpu.memory_space<vmem>>, vector<16x512xf32>,
    %c0_i32_8 = arith.constant 0 : i32
    %9 = arith.cmpi eq, %arg2, %c0_i32_8 : i32
    %10 = arith.extui %9 : i1 to i32
    %c0_i32_9 = arith.constant 0 : i32
    %11 = arith.cmpi ne, %10, %c0_i32_9 : i32
    scf.if %11 {
      %c0_10 = arith.constant 0 : index
      %c0_11 = arith.constant 0 : index
      %12 = vector.load %arg6[%c0_10, %c0_11] : memref<16x512xf32, #tpu.memory_space<vmem>>, vector<16x512xf32>
      %c0_12 = arith.constant 0 : index
      %c0_13 = arith.constant 0 : index
      %13 = vector.load %arg5[%c0_12, %c0_13] : memref<16x512xf32, #tpu.memory_space<vmem>>, vector<16x512xf32>
      tpu.vector_store %arg5[%c0_12, %c0_13], %12 {strides = array<i32>} : memref<16x512xf32, #tpu.memory_space<vmem>>, vector<16x512xf32>,
    } else {
    }
    return
  }
  func.func @transform_0(%arg0: i32, %arg1: i32, %arg2: i32) -> (i32, i32) {
    %c0_i32 = arith.constant 0 : i32
    return %arg0, %arg2 : i32, i32
  }
  func.func @transform_1(%arg0: i32, %arg1: i32, %arg2: i32) -> (i32, i32) {
    %c0_i32 = arith.constant 0 : i32
    return %arg2, %arg1 : i32, i32
  }
  func.func @transform_2(%arg0: i32, %arg1: i32, %arg2: i32) -> (i32, i32) {
    %c0_i32 = arith.constant 0 : i32
    return %arg0, %arg1 : i32, i32
  }
}

</mosaic_0001>

<llo_original>
// kernel: tpu_custom_call.1
$region0: #{tpu_custom_call.1}
  #allocation0 [shape = 'u32[]', space=smem, size = 0x4, offset = 0x4, fixed_abs, tag = 'smem constant byte address 0x4 - core index']
  #allocation1 [shape = 'u32[144,128]{1,0:T(1,128)}', space=vmem, size = 0x12000, scoped, tag = 'internal scratch']
  #allocation2 [shape = 'f32[16,512]{1,0:T(8,128)}', space=vmem, size = 0x8000, scoped, tag = 'scratch operand']
  %s0 = inlined_call_operand.hbm [shape: f32[16,512], index: 0, kind: input, shape index: {}]
  %s1 = inlined_call_operand.hbm [shape: f32[512,1024], index: 1, kind: input, shape index: {}]
  %s2 = inlined_call_operand.hbm [shape: f32[16,1024], index: 2, kind: output, shape index: {}]
  %s3 = sld [smem:[#allocation0]]
  $region57: #{tpu_custom_call.1} parent=0
    _
  %s5 = ssub.s32 1, %s3
  %s6 = scalar_select 0, %s5, %s3
  $region1: #{tpu_custom_call.1} parent=0
    #allocation3 [shape = 'u8[32768]{0}', space=vmem, size = 0x8000, scoped, tag = 'input window, operand 0, single buffered']
    #allocation4 [shape = 's32[2]{0}', space=sflag, size = 0x8, scoped, tag = 'scoped memory for tpu_custom_call.1']
    #allocation5 [shape = 's32[2]{0}', space=sflag, size = 0x8, scoped, tag = 'scoped memory for tpu_custom_call.1']
    #allocation6 [shape = 'u8[2097152]{0}', space=vmem, size = 0x200000, scoped, tag = 'input window, operand 1']
    #allocation7 [shape = 's32[2]{0}', space=sflag, size = 0x8, scoped, tag = 'scoped memory for tpu_custom_call.1']
    #allocation8 [shape = 'u8[65536]{0}', space=vmem, size = 0x10000, scoped, tag = 'output window, operand 0']
    %7 = vsyncpa [#allocation4], 0
    %8 = vsyncpa [#allocation7], 0
    %s9 = scalar_lea.sflag [#allocation7], 1
    %10 = vsyncpa %s9, 0
    %11 = vsyncpa [#allocation5], 0
    %s12 = scalar_lea.sflag [#allocation5], 1
    %13 = vsyncpa %s12, 0
    loop: start=0, step=1, limit=4
    $region2: #{tpu_custom_call.1} parent=1 // loop_pre_header
      _
    $region3: #{tpu_custom_call.1} parent=1 // loop_header
      %s15 = sphi 0, %s19
      %p16 = scmp.ge.s32.totalorder %s15, 4
      %s22 = sphi 0, %s41
      %s23 = sphi 0, %s37
      %s24 = sphi 0, %s33
      %s25 = sphi 0, %s22
      %s26 = sphi 0, %s23
      %s27 = sphi 0, %s24
      %s28 = sphi 0, %s25
      %s29 = sphi 0, %s26
      %s30 = sphi 0, %s27
      %s46 = sphi 0, %s48
      %s49 = sphi 0, %s46
      %s50 = sphi 0, %s49
      %s66 = sphi 0, %s50
      %s74 = sphi 0, %s76
      %s77 = sphi 0, %s74
      %s78 = sphi 0, %s77
      %s94 = sphi 0, %s78
      %s102 = sphi 0, %s104
      %s105 = sphi 0, %s102
      %s106 = sphi 0, %s105
      %s122 = sphi 0, %s106
    $region4: #{tpu_custom_call.1} parent=1 // loop_header_branch
      %18 = sbr.rel (%p16) target = $region8
    $region5: #{tpu_custom_call.1} parent=1 // loop_body
      %s20 = ssub.s32 %s15, 1
      %s21 = ssub.s32 %s15, 2
      %s31 = sadd.s32 1, %s24
      %p32 = scmp.ge.s32.totalorder %s31, 1
      %s33 = scalar_select %p32, 0, %s31
      %s34 = sadd.s32 1, %s23
      %s35 = scalar_select %p32, %s34, %s23
      %p36 = scmp.ge.s32.totalorder %s35, 2
      %s37 = scalar_select %p36, 0, %s35
      %s38 = sadd.s32 1, %s22
      %s39 = scalar_select %p36, %s38, %s22
      %p40 = scmp.ge.s32.totalorder %s39, 1
      %s41 = scalar_select %p40, 0, %s39
      %s42 = ssub.s32 %s22, %s41
      %s43 = ssub.s32 %s24, %s33
      %s44 = sor.u32 %s42, %s43
      %p45 = scmp.eq.s32.totalorder %s44, 0
      %s47 = sadd.s32 %s46, 1
      %s48 = scalar_select %p45, %s46, %s47
      %p51 = pneg %p45
      %p52 = scmp.eq.s32.totalorder %s15, 1
      %p53 = por %p51, %p52
      %p54 = scmp.ne.s32.totalorder %s46, %s49
      %p55 = scmp.eq.s32.totalorder %s15, 0
      %p56 = por %p54, %p55
      %p57 = scmp.ne.s32.totalorder %s46, %s49
      %p58 = scmp.eq.s32.totalorder %s20, 1
      %p59 = por %p57, %p58
      %p60 = scmp.ne.s32.totalorder %s49, %s50
      %p61 = scmp.eq.s32.totalorder %s20, 0
      %p62 = por %p60, %p61
      %p63 = scmp.ne.s32.totalorder %s49, %s50
      %p64 = scmp.eq.s32.totalorder %s21, 1
      %p65 = por %p63, %p64
      %p67 = scmp.ne.s32.totalorder %s50, %s66
      %p68 = scmp.eq.s32.totalorder %s21, 0
      %p69 = por %p67, %p68
      %s70 = ssub.s32 %s24, %s33
      %s71 = ssub.s32 %s23, %s37
      %s72 = sor.u32 %s70, %s71
      %p73 = scmp.eq.s32.totalorder %s72, 0
      %s75 = sadd.s32 %s74, 1
      %s76 = scalar_select %p73, %s74, %s75
      %p79 = pneg %p73
      %p80 = scmp.eq.s32.totalorder %s15, 1
      %p81 = por %p79, %p80
      %p82 = scmp.ne.s32.totalorder %s74, %s77
      %p83 = scmp.eq.s32.totalorder %s15, 0
      %p84 = por %p82, %p83
      %p85 = scmp.ne.s32.totalorder %s74, %s77
      %p86 = scmp.eq.s32.totalorder %s20, 1
      %p87 = por %p85, %p86
      %p88 = scmp.ne.s32.totalorder %s77, %s78
      %p89 = scmp.eq.s32.totalorder %s20, 0
      %p90 = por %p88, %p89
      %p91 = scmp.ne.s32.totalorder %s77, %s78
      %p92 = scmp.eq.s32.totalorder %s21, 1
      %p93 = por %p91, %p92
      %p95 = scmp.ne.s32.totalorder %s78, %s94
      %p96 = scmp.eq.s32.totalorder %s21, 0
      %p97 = por %p95, %p96
      %s98 = ssub.s32 %s22, %s41
      %s99 = ssub.s32 %s23, %s37
      %s100 = sor.u32 %s98, %s99
      %p101 = scmp.eq.s32.totalorder %s100, 0
      %s103 = sadd.s32 %s102, 1
      %s104 = scalar_select %p101, %s102, %s103
      %p107 = pneg %p101
      %p108 = scmp.eq.s32.totalorder %s15, 1
      %p109 = por %p107, %p108
      %p110 = scmp.ne.s32.totalorder %s102, %s105
      %p111 = scmp.eq.s32.totalorder %s15, 0
      %p112 = por %p110, %p111
      %p113 = scmp.ne.s32.totalorder %s102, %s105
      %p114 = scmp.eq.s32.totalorder %s20, 1
      %p115 = por %p113, %p114
      %p116 = scmp.ne.s32.totalorder %s105, %s106
      %p117 = scmp.eq.s32.totalorder %s20, 0
      %p118 = por %p116, %p117
      %p119 = scmp.ne.s32.totalorder %s105, %s106
      %p120 = scmp.eq.s32.totalorder %s21, 1
      %p121 = por %p119, %p120
      %p123 = scmp.ne.s32.totalorder %s106, %s122
      %p124 = scmp.eq.s32.totalorder %s21, 0
      %p125 = por %p123, %p124
      %p126 = scmp.le.s32.totalorder 1, %s15
      %p127 = scmp.lt.s32.totalorder %s15, 3
      %p128 = pnand %p126, %p127
      %p129 = pneg %p128
      // Predicated region
      $region9: #{tpu_custom_call.1} parent=5 // pred_check
        _
      $region10: #{tpu_custom_call.1} parent=5 // pred_check_branch
        %131 = sbr.rel (%p128) target = $region12
      $region11: #{tpu_custom_call.1} parent=5 // pred_region
        %s132 = ssub.s32 %s15, 1
        // Predicated region
        $region13: #{tpu_custom_call.1} parent=11 // pred_check
          %p133 = pneg %p62
        $region14: #{tpu_custom_call.1} parent=11 // pred_check_branch
          %135 = sbr.rel (%p133) target = $region16
        $region15: #{tpu_custom_call.1} parent=11 // pred_region
          %s136 = smul.u32 2, %s25
          %s137 = smul.u32 4, %s27
          %s139 = ssub.s32 1024, 1024
          %140 = vsyncadd [#allocation4], %s139
          %s141 = smul.addr %s136, 4
          %s142 = sadd.s32 %s137, %s141
          %s143 = smul.addr %s142, 128
          %s144 = scalar_lea.hbm %s0, %s143
          %s145 = sshll.u32 [#allocation3], 4
          %s146 = int_to_ptr.vmem [resolvable:$true] %s145
          %151 = dma.hbm_to_vmem [thread:$0]  %s144, 1024, %s146, [#allocation4], 512, 512, 32
        $region16: #{tpu_custom_call.1} parent=11 // pred_fallthru
          _
      $region12: #{tpu_custom_call.1} parent=5 // pred_fallthru
        _
      %p152 = scmp.lt.s32.totalorder %s15, 2
      // Predicated region
      $region17: #{tpu_custom_call.1} parent=5 // pred_check
        %p153 = pneg %p152
      $region18: #{tpu_custom_call.1} parent=5 // pred_check_branch
        %155 = sbr.rel (%p153) target = $region20
      $region19: #{tpu_custom_call.1} parent=5 // pred_region
        // Predicated region
        $region21: #{tpu_custom_call.1} parent=19 // pred_check
          %p156 = pneg %p84
        $region22: #{tpu_custom_call.1} parent=19 // pred_check_branch
          %158 = sbr.rel (%p156) target = $region24
        $region23: #{tpu_custom_call.1} parent=19 // pred_region
          %s159 = sand.u32 %s74, 1
          %s160 = scalar_lea.sflag [#allocation7], %s159
          %s161 = sand.u32 %s74, 1
          %s162 = smul.addr %s161, 2048
          %s163 = scalar_lea.vmem [#allocation6], %s162
          %s164 = smul.u32 64, %s24
          %s165 = smul.u32 4, %s23
          %s167 = ssub.s32 32768, 32768
          %168 = vsyncadd %s160, %s167
          %s169 = smul.addr %s164, 8
          %s170 = sadd.s32 %s165, %s169
          %s171 = smul.addr %s170, 128
          %s172 = scalar_lea.hbm %s1, %s171
          %s173 = sshll.u32 %s163, 4
          %s174 = int_to_ptr.vmem [resolvable:$true] %s173
          %179 = dma.hbm_to_vmem [thread:$0]  %s172, 32768, %s174, %s160, 1024, 512, 32
        $region24: #{tpu_custom_call.1} parent=19 // pred_fallthru
          _
      $region20: #{tpu_custom_call.1} parent=5 // pred_fallthru
        _
      %p180 = scmp.le.s32.totalorder 1, %s15
      %p181 = scmp.lt.s32.totalorder %s15, 3
      %p182 = pnand %p180, %p181
      %p183 = pneg %p182
      // Predicated region
      $region25: #{tpu_custom_call.1} parent=5 // pred_check
        _
      $region26: #{tpu_custom_call.1} parent=5 // pred_check_branch
        %185 = sbr.rel (%p182) target = $region28
      $region27: #{tpu_custom_call.1} parent=5 // pred_region
        %s186 = ssub.s32 %s15, 1
        // Predicated region
        $region29: #{tpu_custom_call.1} parent=27 // pred_check
          %p187 = pneg %p62
        $region30: #{tpu_custom_call.1} parent=27 // pred_check_branch
          %189 = sbr.rel (%p187) target = $region32
        $region31: #{tpu_custom_call.1} parent=27 // pred_region
          %190 = dma.done [#allocation4], 1024
        $region32: #{tpu_custom_call.1} parent=27 // pred_fallthru
          _
        %s191 = sand.u32 %s77, 1
        %s192 = scalar_lea.sflag [#allocation7], %s191
        %s193 = sand.u32 %s77, 1
        %s194 = smul.addr %s193, 2048
        %s195 = scalar_lea.vmem [#allocation6], %s194
        // Predicated region
        $region33: #{tpu_custom_call.1} parent=27 // pred_check
          %p196 = pneg %p90
        $region34: #{tpu_custom_call.1} parent=27 // pred_check_branch
          %198 = sbr.rel (%p196) target = $region36
        $region35: #{tpu_custom_call.1} parent=27 // pred_region
          %199 = dma.done %s192, 32768
        $region36: #{tpu_custom_call.1} parent=27 // pred_fallthru
          _
        %p200 = pneg %p62
        %p201 = pneg %p59
        %s202 = sand.u32 %s77, 1
        %s203 = scalar_lea.sflag [#allocation7], %s202
        %s204 = sand.u32 %s77, 1
        %s205 = smul.addr %s204, 2048
        %s206 = scalar_lea.vmem [#allocation6], %s205
        %p207 = pneg %p90
        %p208 = pneg %p87
        %p209 = pneg %p118
        %p210 = pneg %p115
        %s211 = sand.u32 %s105, 1
        %s212 = scalar_lea.sflag [#allocation5], %s211
        %s213 = sand.u32 %s105, 1
        %s214 = smul.addr %s213, 64
        %s215 = scalar_lea.vmem [#allocation8], %s214
        %s216 = smul.u32 2, %s25
        %s217 = smul.u32 4, %s27
        %s218 = smul.u32 64, %s27
        %s219 = smul.u32 4, %s26
        %s220 = smul.u32 2, %s25
        %s221 = smul.u32 4, %s26
        %p222 = scmp.eq.s32.totalorder %s27, 0
        // Predicated region
        $region37: #{tpu_custom_call.1} parent=27 // pred_check
          %p223 = pneg %p222
        $region38: #{tpu_custom_call.1} parent=27 // pred_check_branch
          %225 = sbr.rel (%p223) target = $region40
        $region39: #{tpu_custom_call.1} parent=27 // pred_region
          %226 = vst [vmem:[#allocation2] sm:$0xff] 0.0
          %227 = vst [vmem:[#allocation2 + $0x8] sm:$0xff] 0.0
          %228 = vst [vmem:[#allocation2 + $0x10] sm:$0xff] 0.0
          %229 = vst [vmem:[#allocation2 + $0x18] sm:$0xff] 0.0
          %230 = vst [vmem:[#allocation2 + $0x20] sm:$0xff] 0.0
          %231 = vst [vmem:[#allocation2 + $0x28] sm:$0xff] 0.0
          %232 = vst [vmem:[#allocation2 + $0x30] sm:$0xff] 0.0
          %233 = vst [vmem:[#allocation2 + $0x38] sm:$0xff] 0.0
        $region40: #{tpu_custom_call.1} parent=27 // pred_fallthru
          _
        %v234 = vld [vmem:[#allocation2] sm:$0xff]
        %v235 = vld [vmem:[#allocation2 + $0x8] sm:$0xff]
        %v236 = vld [vmem:[#allocation2 + $0x10] sm:$0xff]
        %v237 = vld [vmem:[#allocation2 + $0x18] sm:$0xff]
        %v238 = vld [vmem:[#allocation2 + $0x20] sm:$0xff]
        %v239 = vld [vmem:[#allocation2 + $0x28] sm:$0xff]
        %v240 = vld [vmem:[#allocation2 + $0x30] sm:$0xff]
        %v241 = vld [vmem:[#allocation2 + $0x38] sm:$0xff]
        %v242 = vld [vmem:[#allocation3] sm:$0xff]
        %v243 = vld [vmem:[#allocation3 + $0x8] sm:$0xff]
        %v244 = vld [vmem:[#allocation3 + $0x10] sm:$0xff]
        %v245 = vld [vmem:[#allocation3 + $0x18] sm:$0xff]
        %v246 = vld [vmem:[#allocation3 + $0x20] sm:$0xff]
        %v247 = vld [vmem:[#allocation3 + $0x28] sm:$0xff]
        %v248 = vld [vmem:[#allocation3 + $0x30] sm:$0xff]
        %v249 = vld [vmem:[#allocation3 + $0x38] sm:$0xff]
        %v250 = vld [vmem:[%s195] sm:$0xff]
        %v251 = vld [vmem:[%s195 + $0x8] sm:$0xff]
        %v252 = vld [vmem:[%s195 + $0x10] sm:$0xff]
        %v253 = vld [vmem:[%s195 + $0x18] sm:$0xff]
        %v254 = vld [vmem:[%s195 + $0x20] sm:$0xff]
        %v255 = vld [vmem:[%s195 + $0x28] sm:$0xff]
        %v256 = vld [vmem:[%s195 + $0x30] sm:$0xff]
        %v257 = vld [vmem:[%s195 + $0x38] sm:$0xff]
        %v258 = vld [vmem:[%s195 + $0x40] sm:$0xff]
        %v259 = vld [vmem:[%s195 + $0x48] sm:$0xff]
        %v260 = vld [vmem:[%s195 + $0x50] sm:$0xff]
        %v261 = vld [vmem:[%s195 + $0x58] sm:$0xff]
        %v262 = vld [vmem:[%s195 + $0x60] sm:$0xff]
        %v263 = vld [vmem:[%s195 + $0x68] sm:$0xff]
        %v264 = vld [vmem:[%s195 + $0x70] sm:$0xff]
        %v265 = vld [vmem:[%s195 + $0x78] sm:$0xff]
        %v266 = vld [vmem:[%s195 + $0x80] sm:$0xff]
        %v267 = vld [vmem:[%s195 + $0x88] sm:$0xff]
        %v268 = vld [vmem:[%s195 + $0x90] sm:$0xff]
        %v269 = vld [vmem:[%s195 + $0x98] sm:$0xff]
        %v270 = vld [vmem:[%s195 + $0xa0] sm:$0xff]
        %v271 = vld [vmem:[%s195 + $0xa8] sm:$0xff]
        %v272 = vld [vmem:[%s195 + $0xb0] sm:$0xff]
        %v273 = vld [vmem:[%s195 + $0xb8] sm:$0xff]
        %v274 = vld [vmem:[%s195 + $0xc0] sm:$0xff]
        %v275 = vld [vmem:[%s195 + $0xc8] sm:$0xff]
        %v276 = vld [vmem:[%s195 + $0xd0] sm:$0xff]
        %v277 = vld [vmem:[%s195 + $0xd8] sm:$0xff]
        %v278 = vld [vmem:[%s195 + $0xe0] sm:$0xff]
        %v279 = vld [vmem:[%s195 + $0xe8] sm:$0xff]
        %v280 = vld [vmem:[%s195 + $0xf0] sm:$0xff]
        %v281 = vld [vmem:[%s195 + $0xf8] sm:$0xff]
        %v282 = vld [vmem:[%s195 + $0x100] sm:$0xff]
        %v283 = vld [vmem:[%s195 + $0x108] sm:$0xff]
        %v284 = vld [vmem:[%s195 + $0x110] sm:$0xff]
        %v285 = vld [vmem:[%s195 + $0x118] sm:$0xff]
        %v286 = vld [vmem:[%s195 + $0x120] sm:$0xff]
        %v287 = vld [vmem:[%s195 + $0x128] sm:$0xff]
        %v288 = vld [vmem:[%s195 + $0x130] sm:$0xff]
        %v289 = vld [vmem:[%s195 + $0x138] sm:$0xff]
        %v290 = vld [vmem:[%s195 + $0x140] sm:$0xff]
        %v291 = vld [vmem:[%s195 + $0x148] sm:$0xff]
        %v292 = vld [vmem:[%s195 + $0x150] sm:$0xff]
        %v293 = vld [vmem:[%s195 + $0x158] sm:$0xff]
        %v294 = vld [vmem:[%s195 + $0x160] sm:$0xff]
        %v295 = vld [vmem:[%s195 + $0x168] sm:$0xff]
        %v296 = vld [vmem:[%s195 + $0x170] sm:$0xff]
        %v297 = vld [vmem:[%s195 + $0x178] sm:$0xff]
        %v298 = vld [vmem:[%s195 + $0x180] sm:$0xff]
        %v299 = vld [vmem:[%s195 + $0x188] sm:$0xff]
        %v300 = vld [vmem:[%s195 + $0x190] sm:$0xff]
        %v301 = vld [vmem:[%s195 + $0x198] sm:$0xff]
        %v302 = vld [vmem:[%s195 + $0x1a0] sm:$0xff]
        %v303 = vld [vmem:[%s195 + $0x1a8] sm:$0xff]
        %v304 = vld [vmem:[%s195 + $0x1b0] sm:$0xff]
        %v305 = vld [vmem:[%s195 + $0x1b8] sm:$0xff]
        %v306 = vld [vmem:[%s195 + $0x1c0] sm:$0xff]
        %v307 = vld [vmem:[%s195 + $0x1c8] sm:$0xff]
        %v308 = vld [vmem:[%s195 + $0x1d0] sm:$0xff]
        %v309 = vld [vmem:[%s195 + $0x1d8] sm:$0xff]
        %v310 = vld [vmem:[%s195 + $0x1e0] sm:$0xff]
        %v311 = vld [vmem:[%s195 + $0x1e8] sm:$0xff]
        %v312 = vld [vmem:[%s195 + $0x1f0] sm:$0xff]
        %v313 = vld [vmem:[%s195 + $0x1f8] sm:$0xff]
        %v314 = vld [vmem:[%s195 + $0x200] sm:$0xff]
        %v315 = vld [vmem:[%s195 + $0x208] sm:$0xff]
        %v316 = vld [vmem:[%s195 + $0x210] sm:$0xff]
        %v317 = vld [vmem:[%s195 + $0x218] sm:$0xff]
        %v318 = vld [vmem:[%s195 + $0x220] sm:$0xff]
        %v319 = vld [vmem:[%s195 + $0x228] sm:$0xff]
        %v320 = vld [vmem:[%s195 + $0x230] sm:$0xff]
        %v321 = vld [vmem:[%s195 + $0x238] sm:$0xff]
        %v322 = vld [vmem:[%s195 + $0x240] sm:$0xff]
        %v323 = vld [vmem:[%s195 + $0x248] sm:$0xff]
        %v324 = vld [vmem:[%s195 + $0x250] sm:$0xff]
        %v325 = vld [vmem:[%s195 + $0x258] sm:$0xff]
        %v326 = vld [vmem:[%s195 + $0x260] sm:$0xff]
        %v327 = vld [vmem:[%s195 + $0x268] sm:$0xff]
        %v328 = vld [vmem:[%s195 + $0x270] sm:$0xff]
        %v329 = vld [vmem:[%s195 + $0x278] sm:$0xff]
        %v330 = vld [vmem:[%s195 + $0x280] sm:$0xff]
        %v331 = vld [vmem:[%s195 + $0x288] sm:$0xff]
        %v332 = vld [vmem:[%s195 + $0x290] sm:$0xff]
        %v333 = vld [vmem:[%s195 + $0x298] sm:$0xff]
        %v334 = vld [vmem:[%s195 + $0x2a0] sm:$0xff]
        %v335 = vld [vmem:[%s195 + $0x2a8] sm:$0xff]
        %v336 = vld [vmem:[%s195 + $0x2b0] sm:$0xff]
        %v337 = vld [vmem:[%s195 + $0x2b8] sm:$0xff]
        %v338 = vld [vmem:[%s195 + $0x2c0] sm:$0xff]
        %v339 = vld [vmem:[%s195 + $0x2c8] sm:$0xff]
        %v340 = vld [vmem:[%s195 + $0x2d0] sm:$0xff]
        %v341 = vld [vmem:[%s195 + $0x2d8] sm:$0xff]
        %v342 = vld [vmem:[%s195 + $0x2e0] sm:$0xff]
        %v343 = vld [vmem:[%s195 + $0x2e8] sm:$0xff]
        %v344 = vld [vmem:[%s195 + $0x2f0] sm:$0xff]
        %v345 = vld [vmem:[%s195 + $0x2f8] sm:$0xff]
        %v346 = vld [vmem:[%s195 + $0x300] sm:$0xff]
        %v347 = vld [vmem:[%s195 + $0x308] sm:$0xff]
        %v348 = vld [vmem:[%s195 + $0x310] sm:$0xff]
        %v349 = vld [vmem:[%s195 + $0x318] sm:$0xff]
        %v350 = vld [vmem:[%s195 + $0x320] sm:$0xff]
        %v351 = vld [vmem:[%s195 + $0x328] sm:$0xff]
        %v352 = vld [vmem:[%s195 + $0x330] sm:$0xff]
        %v353 = vld [vmem:[%s195 + $0x338] sm:$0xff]
        %v354 = vld [vmem:[%s195 + $0x340] sm:$0xff]
        %v355 = vld [vmem:[%s195 + $0x348] sm:$0xff]
        %v356 = vld [vmem:[%s195 + $0x350] sm:$0xff]
        %v357 = vld [vmem:[%s195 + $0x358] sm:$0xff]
        %v358 = vld [vmem:[%s195 + $0x360] sm:$0xff]
        %v359 = vld [vmem:[%s195 + $0x368] sm:$0xff]
        %v360 = vld [vmem:[%s195 + $0x370] sm:$0xff]
        %v361 = vld [vmem:[%s195 + $0x378] sm:$0xff]
        %v362 = vld [vmem:[%s195 + $0x380] sm:$0xff]
        %v363 = vld [vmem:[%s195 + $0x388] sm:$0xff]
        %v364 = vld [vmem:[%s195 + $0x390] sm:$0xff]
        %v365 = vld [vmem:[%s195 + $0x398] sm:$0xff]
        %v366 = vld [vmem:[%s195 + $0x3a0] sm:$0xff]
        %v367 = vld [vmem:[%s195 + $0x3a8] sm:$0xff]
        %v368 = vld [vmem:[%s195 + $0x3b0] sm:$0xff]
        %v369 = vld [vmem:[%s195 + $0x3b8] sm:$0xff]
        %v370 = vld [vmem:[%s195 + $0x3c0] sm:$0xff]
        %v371 = vld [vmem:[%s195 + $0x3c8] sm:$0xff]
        %v372 = vld [vmem:[%s195 + $0x3d0] sm:$0xff]
        %v373 = vld [vmem:[%s195 + $0x3d8] sm:$0xff]
        %v374 = vld [vmem:[%s195 + $0x3e0] sm:$0xff]
        %v375 = vld [vmem:[%s195 + $0x3e8] sm:$0xff]
        %v376 = vld [vmem:[%s195 + $0x3f0] sm:$0xff]
        %v377 = vld [vmem:[%s195 + $0x3f8] sm:$0xff]
        %v378 = vld [vmem:[%s195 + $0x400] sm:$0xff]
        %v379 = vld [vmem:[%s195 + $0x408] sm:$0xff]
        %v380 = vld [vmem:[%s195 + $0x410] sm:$0xff]
        %v381 = vld [vmem:[%s195 + $0x418] sm:$0xff]
        %v382 = vld [vmem:[%s195 + $0x420] sm:$0xff]
        %v383 = vld [vmem:[%s195 + $0x428] sm:$0xff]
        %v384 = vld [vmem:[%s195 + $0x430] sm:$0xff]
        %v385 = vld [vmem:[%s195 + $0x438] sm:$0xff]
        %v386 = vld [vmem:[%s195 + $0x440] sm:$0xff]
        %v387 = vld [vmem:[%s195 + $0x448] sm:$0xff]
        %v388 = vld [vmem:[%s195 + $0x450] sm:$0xff]
        %v389 = vld [vmem:[%s195 + $0x458] sm:$0xff]
        %v390 = vld [vmem:[%s195 + $0x460] sm:$0xff]
        %v391 = vld [vmem:[%s195 + $0x468] sm:$0xff]
        %v392 = vld [vmem:[%s195 + $0x470] sm:$0xff]
        %v393 = vld [vmem:[%s195 + $0x478] sm:$0xff]
        %v394 = vld [vmem:[%s195 + $0x480] sm:$0xff]
        %v395 = vld [vmem:[%s195 + $0x488] sm:$0xff]
        %v396 = vld [vmem:[%s195 + $0x490] sm:$0xff]
        %v397 = vld [vmem:[%s195 + $0x498] sm:$0xff]
        %v398 = vld [vmem:[%s195 + $0x4a0] sm:$0xff]
        %v399 = vld [vmem:[%s195 + $0x4a8] sm:$0xff]
        %v400 = vld [vmem:[%s195 + $0x4b0] sm:$0xff]
        %v401 = vld [vmem:[%s195 + $0x4b8] sm:$0xff]
        %v402 = vld [vmem:[%s195 + $0x4c0] sm:$0xff]
        %v403 = vld [vmem:[%s195 + $0x4c8] sm:$0xff]
        %v404 = vld [vmem:[%s195 + $0x4d0] sm:$0xff]
        %v405 = vld [vmem:[%s195 + $0x4d8] sm:$0xff]
        %v406 = vld [vmem:[%s195 + $0x4e0] sm:$0xff]
        %v407 = vld [vmem:[%s195 + $0x4e8] sm:$0xff]
        %v408 = vld [vmem:[%s195 + $0x4f0] sm:$0xff]
        %v409 = vld [vmem:[%s195 + $0x4f8] sm:$0xff]
        %v410 = vld [vmem:[%s195 + $0x500] sm:$0xff]
        %v411 = vld [vmem:[%s195 + $0x508] sm:$0xff]
        %v412 = vld [vmem:[%s195 + $0x510] sm:$0xff]
        %v413 = vld [vmem:[%s195 + $0x518] sm:$0xff]
        %v414 = vld [vmem:[%s195 + $0x520] sm:$0xff]
        %v415 = vld [vmem:[%s195 + $0x528] sm:$0xff]
        %v416 = vld [vmem:[%s195 + $0x530] sm:$0xff]
        %v417 = vld [vmem:[%s195 + $0x538] sm:$0xff]
        %v418 = vld [vmem:[%s195 + $0x540] sm:$0xff]
        %v419 = vld [vmem:[%s195 + $0x548] sm:$0xff]
        %v420 = vld [vmem:[%s195 + $0x550] sm:$0xff]
        %v421 = vld [vmem:[%s195 + $0x558] sm:$0xff]
        %v422 = vld [vmem:[%s195 + $0x560] sm:$0xff]
        %v423 = vld [vmem:[%s195 + $0x568] sm:$0xff]
        %v424 = vld [vmem:[%s195 + $0x570] sm:$0xff]
        %v425 = vld [vmem:[%s195 + $0x578] sm:$0xff]
        %v426 = vld [vmem:[%s195 + $0x580] sm:$0xff]
        %v427 = vld [vmem:[%s195 + $0x588] sm:$0xff]
        %v428 = vld [vmem:[%s195 + $0x590] sm:$0xff]
        %v429 = vld [vmem:[%s195 + $0x598] sm:$0xff]
        %v430 = vld [vmem:[%s195 + $0x5a0] sm:$0xff]
        %v431 = vld [vmem:[%s195 + $0x5a8] sm:$0xff]
        %v432 = vld [vmem:[%s195 + $0x5b0] sm:$0xff]
        %v433 = vld [vmem:[%s195 + $0x5b8] sm:$0xff]
        %v434 = vld [vmem:[%s195 + $0x5c0] sm:$0xff]
        %v435 = vld [vmem:[%s195 + $0x5c8] sm:$0xff]
        %v436 = vld [vmem:[%s195 + $0x5d0] sm:$0xff]
        %v437 = vld [vmem:[%s195 + $0x5d8] sm:$0xff]
        %v438 = vld [vmem:[%s195 + $0x5e0] sm:$0xff]
        %v439 = vld [vmem:[%s195 + $0x5e8] sm:$0xff]
        %v440 = vld [vmem:[%s195 + $0x5f0] sm:$0xff]
        %v441 = vld [vmem:[%s195 + $0x5f8] sm:$0xff]
        %v442 = vld [vmem:[%s195 + $0x600] sm:$0xff]
        %v443 = vld [vmem:[%s195 + $0x608] sm:$0xff]
        %v444 = vld [vmem:[%s195 + $0x610] sm:$0xff]
        %v445 = vld [vmem:[%s195 + $0x618] sm:$0xff]
        %v446 = vld [vmem:[%s195 + $0x620] sm:$0xff]
        %v447 = vld [vmem:[%s195 + $0x628] sm:$0xff]
        %v448 = vld [vmem:[%s195 + $0x630] sm:$0xff]
        %v449 = vld [vmem:[%s195 + $0x638] sm:$0xff]
        %v450 = vld [vmem:[%s195 + $0x640] sm:$0xff]
        %v451 = vld [vmem:[%s195 + $0x648] sm:$0xff]
        %v452 = vld [vmem:[%s195 + $0x650] sm:$0xff]
        %v453 = vld [vmem:[%s195 + $0x658] sm:$0xff]
        %v454 = vld [vmem:[%s195 + $0x660] sm:$0xff]
        %v455 = vld [vmem:[%s195 + $0x668] sm:$0xff]
        %v456 = vld [vmem:[%s195 + $0x670] sm:$0xff]
        %v457 = vld [vmem:[%s195 + $0x678] sm:$0xff]
        %v458 = vld [vmem:[%s195 + $0x680] sm:$0xff]
        %v459 = vld [vmem:[%s195 + $0x688] sm:$0xff]
        %v460 = vld [vmem:[%s195 + $0x690] sm:$0xff]
        %v461 = vld [vmem:[%s195 + $0x698] sm:$0xff]
        %v462 = vld [vmem:[%s195 + $0x6a0] sm:$0xff]
        %v463 = vld [vmem:[%s195 + $0x6a8] sm:$0xff]
        %v464 = vld [vmem:[%s195 + $0x6b0] sm:$0xff]
        %v465 = vld [vmem:[%s195 + $0x6b8] sm:$0xff]
        %v466 = vld [vmem:[%s195 + $0x6c0] sm:$0xff]
        %v467 = vld [vmem:[%s195 + $0x6c8] sm:$0xff]
        %v468 = vld [vmem:[%s195 + $0x6d0] sm:$0xff]
        %v469 = vld [vmem:[%s195 + $0x6d8] sm:$0xff]
        %v470 = vld [vmem:[%s195 + $0x6e0] sm:$0xff]
        %v471 = vld [vmem:[%s195 + $0x6e8] sm:$0xff]
        %v472 = vld [vmem:[%s195 + $0x6f0] sm:$0xff]
        %v473 = vld [vmem:[%s195 + $0x6f8] sm:$0xff]
        %v474 = vld [vmem:[%s195 + $0x700] sm:$0xff]
        %v475 = vld [vmem:[%s195 + $0x708] sm:$0xff]
        %v476 = vld [vmem:[%s195 + $0x710] sm:$0xff]
        %v477 = vld [vmem:[%s195 + $0x718] sm:$0xff]
        %v478 = vld [vmem:[%s195 + $0x720] sm:$0xff]
        %v479 = vld [vmem:[%s195 + $0x728] sm:$0xff]
        %v480 = vld [vmem:[%s195 + $0x730] sm:$0xff]
        %v481 = vld [vmem:[%s195 + $0x738] sm:$0xff]
        %v482 = vld [vmem:[%s195 + $0x740] sm:$0xff]
        %v483 = vld [vmem:[%s195 + $0x748] sm:$0xff]
        %v484 = vld [vmem:[%s195 + $0x750] sm:$0xff]
        %v485 = vld [vmem:[%s195 + $0x758] sm:$0xff]
        %v486 = vld [vmem:[%s195 + $0x760] sm:$0xff]
        %v487 = vld [vmem:[%s195 + $0x768] sm:$0xff]
        %v488 = vld [vmem:[%s195 + $0x770] sm:$0xff]
        %v489 = vld [vmem:[%s195 + $0x778] sm:$0xff]
        %v490 = vld [vmem:[%s195 + $0x780] sm:$0xff]
        %v491 = vld [vmem:[%s195 + $0x788] sm:$0xff]
        %v492 = vld [vmem:[%s195 + $0x790] sm:$0xff]
        %v493 = vld [vmem:[%s195 + $0x798] sm:$0xff]
        %v494 = vld [vmem:[%s195 + $0x7a0] sm:$0xff]
        %v495 = vld [vmem:[%s195 + $0x7a8] sm:$0xff]
        %v496 = vld [vmem:[%s195 + $0x7b0] sm:$0xff]
        %v497 = vld [vmem:[%s195 + $0x7b8] sm:$0xff]
        %v498 = vld [vmem:[%s195 + $0x7c0] sm:$0xff]
        %v499 = vld [vmem:[%s195 + $0x7c8] sm:$0xff]
        %v500 = vld [vmem:[%s195 + $0x7d0] sm:$0xff]
        %v501 = vld [vmem:[%s195 + $0x7d8] sm:$0xff]
        %v502 = vld [vmem:[%s195 + $0x7e0] sm:$0xff]
        %v503 = vld [vmem:[%s195 + $0x7e8] sm:$0xff]
        %v504 = vld [vmem:[%s195 + $0x7f0] sm:$0xff]
        %v505 = vld [vmem:[%s195 + $0x7f8] sm:$0xff]
        %506 = vmatprep.subr.mxu0 %v251
        %507 = vmatpush1.msra.mxu0 %v250
        %508 = vmatprep.subr.mxu0 %v255
        %509 = vmatpush1.msra.mxu0 %v254
        %510 = vmatprep.subr.mxu0 %v259
        %511 = vmatpush1.msra.mxu0 %v258
        %512 = vmatprep.subr.mxu0 %v263
        %513 = vmatpush1.msra.mxu0 %v262
        %514 = vmatprep.subr.mxu0 %v267
        %515 = vmatpush1.msra.mxu0 %v266
        %516 = vmatprep.subr.mxu0 %v271
        %517 = vmatpush1.msra.mxu0 %v270
        %518 = vmatprep.subr.mxu0 %v275
        %519 = vmatpush1.msra.mxu0 %v274
        %520 = vmatprep.subr.mxu0 %v279
        %521 = vmatpush1.msra.mxu0 %v278
        %522 = vmatprep.subr.mxu0 %v283
        %523 = vmatpush1.msra.mxu0 %v282
        %524 = vmatprep.subr.mxu0 %v287
        %525 = vmatpush1.msra.mxu0 %v286
        %526 = vmatprep.subr.mxu0 %v291
        %527 = vmatpush1.msra.mxu0 %v290
        %528 = vmatprep.subr.mxu0 %v295
        %529 = vmatpush1.msra.mxu0 %v294
        %530 = vmatprep.subr.mxu0 %v299
        %531 = vmatpush1.msra.mxu0 %v298
        %532 = vmatprep.subr.mxu0 %v303
        %533 = vmatpush1.msra.mxu0 %v302
        %534 = vmatprep.subr.mxu0 %v307
        %535 = vmatpush1.msra.mxu0 %v306
        %536 = vmatprep.subr.mxu0 %v311
        %537 = vmatpush1.msra.mxu0 %v310
        %538 = vmatprep.subr.mxu0 %v315
        %539 = vmatpush1.msra.mxu0 %v314
        %540 = vmatprep.subr.mxu0 %v319
        %541 = vmatpush1.msra.mxu0 %v318
        %542 = vmatprep.subr.mxu0 %v323
        %543 = vmatpush1.msra.mxu0 %v322
        %544 = vmatprep.subr.mxu0 %v327
        %545 = vmatpush1.msra.mxu0 %v326
        %546 = vmatprep.subr.mxu0 %v331
        %547 = vmatpush1.msra.mxu0 %v330
        %548 = vmatprep.subr.mxu0 %v335
        %549 = vmatpush1.msra.mxu0 %v334
        %550 = vmatprep.subr.mxu0 %v339
        %551 = vmatpush1.msra.mxu0 %v338
        %552 = vmatprep.subr.mxu0 %v343
        %553 = vmatpush1.msra.mxu0 %v342
        %554 = vmatprep.subr.mxu0 %v347
        %555 = vmatpush1.msra.mxu0 %v346
        %556 = vmatprep.subr.mxu0 %v351
        %557 = vmatpush1.msra.mxu0 %v350
        %558 = vmatprep.subr.mxu0 %v355
        %559 = vmatpush1.msra.mxu0 %v354
        %560 = vmatprep.subr.mxu0 %v359
        %561 = vmatpush1.msra.mxu0 %v358
        %562 = vmatprep.subr.mxu0 %v363
        %563 = vmatpush1.msra.mxu0 %v362
        %564 = vmatprep.subr.mxu0 %v367
        %565 = vmatpush1.msra.mxu0 %v366
        %566 = vmatprep.subr.mxu0 %v371
        %567 = vmatpush1.msra.mxu0 %v370
        %568 = vmatprep.subr.mxu0 %v375
        %569 = vmatpush1.msra.mxu0 %v374
        %570 = vmatprep.mubr.f32.mxu0 %v243
        %571 = vmatmul.mubr.f32.gmra.mrb[0].mxu0 %v242
        %v572 = vpop.f32.mrb[0].mxu0
        %v573 = vadd.f32 0.0, %v572
        %v574 = vpop.f32.mrb[0].mxu0
        %v575 = vadd.f32 0.0, %v574
        %576 = vmatprep.mubr.f32.mxu0 %v247
        %577 = vmatmul.mubr.f32.gmra.mrb[0].mxu0 %v246
        %v578 = vpop.f32.mrb[0].mxu0
        %v579 = vadd.f32 0.0, %v578
        %v580 = vpop.f32.mrb[0].mxu0
        %v581 = vadd.f32 0.0, %v580
        %582 = vdwg.mxu0
        %583 = vmatprep.subr.mxu0 %v379
        %584 = vmatpush1.msra.mxu0 %v378
        %585 = vmatprep.subr.mxu0 %v383
        %586 = vmatpush1.msra.mxu0 %v382
        %587 = vmatprep.subr.mxu0 %v387
        %588 = vmatpush1.msra.mxu0 %v386
        %589 = vmatprep.subr.mxu0 %v391
        %590 = vmatpush1.msra.mxu0 %v390
        %591 = vmatprep.subr.mxu0 %v395
        %592 = vmatpush1.msra.mxu0 %v394
        %593 = vmatprep.subr.mxu0 %v399
        %594 = vmatpush1.msra.mxu0 %v398
        %595 = vmatprep.subr.mxu0 %v403
        %596 = vmatpush1.msra.mxu0 %v402
        %597 = vmatprep.subr.mxu0 %v407
        %598 = vmatpush1.msra.mxu0 %v406
        %599 = vmatprep.subr.mxu0 %v411
        %600 = vmatpush1.msra.mxu0 %v410
        %601 = vmatprep.subr.mxu0 %v415
        %602 = vmatpush1.msra.mxu0 %v414
        %603 = vmatprep.subr.mxu0 %v419
        %604 = vmatpush1.msra.mxu0 %v418
        %605 = vmatprep.subr.mxu0 %v423
        %606 = vmatpush1.msra.mxu0 %v422
        %607 = vmatprep.subr.mxu0 %v427
        %608 = vmatpush1.msra.mxu0 %v426
        %609 = vmatprep.subr.mxu0 %v431
        %610 = vmatpush1.msra.mxu0 %v430
        %611 = vmatprep.subr.mxu0 %v435
        %612 = vmatpush1.msra.mxu0 %v434
        %613 = vmatprep.subr.mxu0 %v439
        %614 = vmatpush1.msra.mxu0 %v438
        %615 = vmatprep.subr.mxu0 %v443
        %616 = vmatpush1.msra.mxu0 %v442
        %617 = vmatprep.subr.mxu0 %v447
        %618 = vmatpush1.msra.mxu0 %v446
        %619 = vmatprep.subr.mxu0 %v451
        %620 = vmatpush1.msra.mxu0 %v450
        %621 = vmatprep.subr.mxu0 %v455
        %622 = vmatpush1.msra.mxu0 %v454
        %623 = vmatprep.subr.mxu0 %v459
        %624 = vmatpush1.msra.mxu0 %v458
        %625 = vmatprep.subr.mxu0 %v463
        %626 = vmatpush1.msra.mxu0 %v462
        %627 = vmatprep.subr.mxu0 %v467
        %628 = vmatpush1.msra.mxu0 %v466
        %629 = vmatprep.subr.mxu0 %v471
        %630 = vmatpush1.msra.mxu0 %v470
        %631 = vmatprep.subr.mxu0 %v475
        %632 = vmatpush1.msra.mxu0 %v474
        %633 = vmatprep.subr.mxu0 %v479
        %634 = vmatpush1.msra.mxu0 %v478
        %635 = vmatprep.subr.mxu0 %v483
        %636 = vmatpush1.msra.mxu0 %v482
        %637 = vmatprep.subr.mxu0 %v487
        %638 = vmatpush1.msra.mxu0 %v486
        %639 = vmatprep.subr.mxu0 %v491
        %640 = vmatpush1.msra.mxu0 %v490
        %641 = vmatprep.subr.mxu0 %v495
        %642 = vmatpush1.msra.mxu0 %v494
        %643 = vmatprep.subr.mxu0 %v499
        %644 = vmatpush1.msra.mxu0 %v498
        %645 = vmatprep.subr.mxu0 %v503
        %646 = vmatpush1.msra.mxu0 %v502
        %647 = vmatprep.mubr.f32.mxu0 %v245
        %648 = vmatmul.mubr.f32.gmra.mrb[0].mxu0 %v244
        %v649 = vpop.f32.mrb[0].mxu0
        %v650 = vadd.f32 %v573, %v649
        %v651 = vpop.f32.mrb[0].mxu0
        %v652 = vadd.f32 %v575, %v651
        %653 = vmatprep.mubr.f32.mxu0 %v249
        %654 = vmatmul.mubr.f32.gmra.mrb[0].mxu0 %v248
        %v655 = vpop.f32.mrb[0].mxu0
        %v656 = vadd.f32 %v579, %v655
        %v657 = vpop.f32.mrb[0].mxu0
        %v658 = vadd.f32 %v581, %v657
        %659 = vdwg.mxu0
        %660 = vmatprep.subr.mxu0 %v253
        %661 = vmatpush1.msra.mxu0 %v252
        %662 = vmatprep.subr.mxu0 %v257
        %663 = vmatpush1.msra.mxu0 %v256
        %664 = vmatprep.subr.mxu0 %v261
        %665 = vmatpush1.msra.mxu0 %v260
        %666 = vmatprep.subr.mxu0 %v265
        %667 = vmatpush1.msra.mxu0 %v264
        %668 = vmatprep.subr.mxu0 %v269
        %669 = vmatpush1.msra.mxu0 %v268
        %670 = vmatprep.subr.mxu0 %v273
        %671 = vmatpush1.msra.mxu0 %v272
        %672 = vmatprep.subr.mxu0 %v277
        %673 = vmatpush1.msra.mxu0 %v276
        %674 = vmatprep.subr.mxu0 %v281
        %675 = vmatpush1.msra.mxu0 %v280
        %676 = vmatprep.subr.mxu0 %v285
        %677 = vmatpush1.msra.mxu0 %v284
        %678 = vmatprep.subr.mxu0 %v289
        %679 = vmatpush1.msra.mxu0 %v288
        %680 = vmatprep.subr.mxu0 %v293
        %681 = vmatpush1.msra.mxu0 %v292
        %682 = vmatprep.subr.mxu0 %v297
        %683 = vmatpush1.msra.mxu0 %v296
        %684 = vmatprep.subr.mxu0 %v301
        %685 = vmatpush1.msra.mxu0 %v300
        %686 = vmatprep.subr.mxu0 %v305
        %687 = vmatpush1.msra.mxu0 %v304
        %688 = vmatprep.subr.mxu0 %v309
        %689 = vmatpush1.msra.mxu0 %v308
        %690 = vmatprep.subr.mxu0 %v313
        %691 = vmatpush1.msra.mxu0 %v312
        %692 = vmatprep.subr.mxu0 %v317
        %693 = vmatpush1.msra.mxu0 %v316
        %694 = vmatprep.subr.mxu0 %v321
        %695 = vmatpush1.msra.mxu0 %v320
        %696 = vmatprep.subr.mxu0 %v325
        %697 = vmatpush1.msra.mxu0 %v324
        %698 = vmatprep.subr.mxu0 %v329
        %699 = vmatpush1.msra.mxu0 %v328
        %700 = vmatprep.subr.mxu0 %v333
        %701 = vmatpush1.msra.mxu0 %v332
        %702 = vmatprep.subr.mxu0 %v337
        %703 = vmatpush1.msra.mxu0 %v336
        %704 = vmatprep.subr.mxu0 %v341
        %705 = vmatpush1.msra.mxu0 %v340
        %706 = vmatprep.subr.mxu0 %v345
        %707 = vmatpush1.msra.mxu0 %v344
        %708 = vmatprep.subr.mxu0 %v349
        %709 = vmatpush1.msra.mxu0 %v348
        %710 = vmatprep.subr.mxu0 %v353
        %711 = vmatpush1.msra.mxu0 %v352
        %712 = vmatprep.subr.mxu0 %v357
        %713 = vmatpush1.msra.mxu0 %v356
        %714 = vmatprep.subr.mxu0 %v361
        %715 = vmatpush1.msra.mxu0 %v360
        %716 = vmatprep.subr.mxu0 %v365
        %717 = vmatpush1.msra.mxu0 %v364
        %718 = vmatprep.subr.mxu0 %v369
        %719 = vmatpush1.msra.mxu0 %v368
        %720 = vmatprep.subr.mxu0 %v373
        %721 = vmatpush1.msra.mxu0 %v372
        %722 = vmatprep.subr.mxu0 %v377
        %723 = vmatpush1.msra.mxu0 %v376
        %724 = vmatprep.mubr.f32.mxu0 %v243
        %725 = vmatmul.mubr.f32.gmra.mrb[0].mxu0 %v242
        %v726 = vpop.f32.mrb[0].mxu0
        %v727 = vadd.f32 0.0, %v726
        %v728 = vpop.f32.mrb[0].mxu0
        %v729 = vadd.f32 0.0, %v728
        %730 = vmatprep.mubr.f32.mxu0 %v247
        %731 = vmatmul.mubr.f32.gmra.mrb[0].mxu0 %v246
        %v732 = vpop.f32.mrb[0].mxu0
        %v733 = vadd.f32 0.0, %v732
        %v734 = vpop.f32.mrb[0].mxu0
        %v735 = vadd.f32 0.0, %v734
        %736 = vdwg.mxu0
        %737 = vmatprep.subr.mxu0 %v381
        %738 = vmatpush1.msra.mxu0 %v380
        %739 = vmatprep.subr.mxu0 %v385
        %740 = vmatpush1.msra.mxu0 %v384
        %741 = vmatprep.subr.mxu0 %v389
        %742 = vmatpush1.msra.mxu0 %v388
        %743 = vmatprep.subr.mxu0 %v393
        %744 = vmatpush1.msra.mxu0 %v392
        %745 = vmatprep.subr.mxu0 %v397
        %746 = vmatpush1.msra.mxu0 %v396
        %747 = vmatprep.subr.mxu0 %v401
        %748 = vmatpush1.msra.mxu0 %v400
        %749 = vmatprep.subr.mxu0 %v405
        %750 = vmatpush1.msra.mxu0 %v404
        %751 = vmatprep.subr.mxu0 %v409
        %752 = vmatpush1.msra.mxu0 %v408
        %753 = vmatprep.subr.mxu0 %v413
        %754 = vmatpush1.msra.mxu0 %v412
        %755 = vmatprep.subr.mxu0 %v417
        %756 = vmatpush1.msra.mxu0 %v416
        %757 = vmatprep.subr.mxu0 %v421
        %758 = vmatpush1.msra.mxu0 %v420
        %759 = vmatprep.subr.mxu0 %v425
        %760 = vmatpush1.msra.mxu0 %v424
        %761 = vmatprep.subr.mxu0 %v429
        %762 = vmatpush1.msra.mxu0 %v428
        %763 = vmatprep.subr.mxu0 %v433
        %764 = vmatpush1.msra.mxu0 %v432
        %765 = vmatprep.subr.mxu0 %v437
        %766 = vmatpush1.msra.mxu0 %v436
        %767 = vmatprep.subr.mxu0 %v441
        %768 = vmatpush1.msra.mxu0 %v440
        %769 = vmatprep.subr.mxu0 %v445
        %770 = vmatpush1.msra.mxu0 %v444
        %771 = vmatprep.subr.mxu0 %v449
        %772 = vmatpush1.msra.mxu0 %v448
        %773 = vmatprep.subr.mxu0 %v453
        %774 = vmatpush1.msra.mxu0 %v452
        %775 = vmatprep.subr.mxu0 %v457
        %776 = vmatpush1.msra.mxu0 %v456
        %777 = vmatprep.subr.mxu0 %v461
        %778 = vmatpush1.msra.mxu0 %v460
        %779 = vmatprep.subr.mxu0 %v465
        %780 = vmatpush1.msra.mxu0 %v464
        %781 = vmatprep.subr.mxu0 %v469
        %782 = vmatpush1.msra.mxu0 %v468
        %783 = vmatprep.subr.mxu0 %v473
        %784 = vmatpush1.msra.mxu0 %v472
        %785 = vmatprep.subr.mxu0 %v477
        %786 = vmatpush1.msra.mxu0 %v476
        %787 = vmatprep.subr.mxu0 %v481
        %788 = vmatpush1.msra.mxu0 %v480
        %789 = vmatprep.subr.mxu0 %v485
        %790 = vmatpush1.msra.mxu0 %v484
        %791 = vmatprep.subr.mxu0 %v489
        %792 = vmatpush1.msra.mxu0 %v488
        %793 = vmatprep.subr.mxu0 %v493
        %794 = vmatpush1.msra.mxu0 %v492
        %795 = vmatprep.subr.mxu0 %v497
        %796 = vmatpush1.msra.mxu0 %v496
        %797 = vmatprep.subr.mxu0 %v501
        %798 = vmatpush1.msra.mxu0 %v500
        %799 = vmatprep.subr.mxu0 %v505
        %800 = vmatpush1.msra.mxu0 %v504
        %801 = vmatprep.mubr.f32.mxu0 %v245
        %802 = vmatmul.mubr.f32.gmra.mrb[0].mxu0 %v244
        %v803 = vpop.f32.mrb[0].mxu0
        %v804 = vadd.f32 %v727, %v803
        %v805 = vpop.f32.mrb[0].mxu0
        %v806 = vadd.f32 %v729, %v805
        %807 = vmatprep.mubr.f32.mxu0 %v249
        %808 = vmatmul.mubr.f32.gmra.mrb[0].mxu0 %v248
        %v809 = vpop.f32.mrb[0].mxu0
        %v810 = vadd.f32 %v733, %v809
        %v811 = vpop.f32.mrb[0].mxu0
        %v812 = vadd.f32 %v735, %v811
        %813 = vdwg.mxu0
        %v814 = vadd.f32 %v234, %v650
        %v815 = vadd.f32 %v235, %v652
        %v816 = vadd.f32 %v236, %v804
        %v817 = vadd.f32 %v237, %v806
        %v818 = vadd.f32 %v238, %v656
        %v819 = vadd.f32 %v239, %v658
        %v820 = vadd.f32 %v240, %v810
        %v821 = vadd.f32 %v241, %v812
        %822 = vst [vmem:[#allocation2] sm:$0xff] %v814
        %823 = vst [vmem:[#allocation2 + $0x8] sm:$0xff] %v815
        %824 = vst [vmem:[#allocation2 + $0x10] sm:$0xff] %v816
        %825 = vst [vmem:[#allocation2 + $0x18] sm:$0xff] %v817
        %826 = vst [vmem:[#allocation2 + $0x20] sm:$0xff] %v818
        %827 = vst [vmem:[#allocation2 + $0x28] sm:$0xff] %v819
        %828 = vst [vmem:[#allocation2 + $0x30] sm:$0xff] %v820
        %829 = vst [vmem:[#allocation2 + $0x38] sm:$0xff] %v821
        // Predicated region
        $region41: #{tpu_custom_call.1} parent=27 // pred_check
          %p830 = pneg %p222
        $region42: #{tpu_custom_call.1} parent=27 // pred_check_branch
          %832 = sbr.rel (%p830) target = $region44
        $region43: #{tpu_custom_call.1} parent=27 // pred_region
          %v833 = vld [vmem:[#allocation2] sm:$0xff]
          %v834 = vld [vmem:[#allocation2 + $0x8] sm:$0xff]
          %v835 = vld [vmem:[#allocation2 + $0x10] sm:$0xff]
          %v836 = vld [vmem:[#allocation2 + $0x18] sm:$0xff]
          %v837 = vld [vmem:[#allocation2 + $0x20] sm:$0xff]
          %v838 = vld [vmem:[#allocation2 + $0x28] sm:$0xff]
          %v839 = vld [vmem:[#allocation2 + $0x30] sm:$0xff]
          %v840 = vld [vmem:[#allocation2 + $0x38] sm:$0xff]
          %841 = vst [vmem:[%s215] sm:$0xff] %v833
          %842 = vst [vmem:[%s215 + $0x8] sm:$0xff] %v834
          %843 = vst [vmem:[%s215 + $0x10] sm:$0xff] %v835
          %844 = vst [vmem:[%s215 + $0x18] sm:$0xff] %v836
          %845 = vst [vmem:[%s215 + $0x20] sm:$0xff] %v837
          %846 = vst [vmem:[%s215 + $0x28] sm:$0xff] %v838
          %847 = vst [vmem:[%s215 + $0x30] sm:$0xff] %v839
          %848 = vst [vmem:[%s215 + $0x38] sm:$0xff] %v840
        $region44: #{tpu_custom_call.1} parent=27 // pred_fallthru
          _
        %s849 = sand.u32 %s105, 1
        %s850 = scalar_lea.sflag [#allocation5], %s849
        %s851 = sand.u32 %s105, 1
        %s852 = smul.addr %s851, 64
        %s853 = scalar_lea.vmem [#allocation8], %s852
        // Predicated region
        $region45: #{tpu_custom_call.1} parent=27 // pred_check
          %p854 = pneg %p115
        $region46: #{tpu_custom_call.1} parent=27 // pred_check_branch
          %856 = sbr.rel (%p854) target = $region48
        $region47: #{tpu_custom_call.1} parent=27 // pred_region
          %s857 = smul.u32 2, %s25
          %s858 = smul.u32 4, %s26
          %s860 = ssub.s32 1024, 1024
          %861 = vsyncadd %s850, %s860
          %s862 = smul.addr %s857, 8
          %s863 = sadd.s32 %s858, %s862
          %s864 = smul.addr %s863, 128
          %s865 = scalar_lea.hbm %s2, %s864
          %s866 = sshll.u32 %s853, 4
          %s867 = int_to_ptr.vmem [resolvable:$true] %s866
          %872 = dma.vmem_to_hbm [thread:$0]  %s867, 1024, %s865, %s850, 512, 1024, 32
        $region48: #{tpu_custom_call.1} parent=27 // pred_fallthru
          _
      $region28: #{tpu_custom_call.1} parent=5 // pred_fallthru
        _
      %p873 = scmp.le.s32.totalorder 2, %s15
      // Predicated region
      $region49: #{tpu_custom_call.1} parent=5 // pred_check
        %p874 = pneg %p873
      $region50: #{tpu_custom_call.1} parent=5 // pred_check_branch
        %876 = sbr.rel (%p874) target = $region52
      $region51: #{tpu_custom_call.1} parent=5 // pred_region
        %s877 = ssub.s32 %s15, 2
        // Predicated region
        $region53: #{tpu_custom_call.1} parent=51 // pred_check
          %p878 = pneg %p121
        $region54: #{tpu_custom_call.1} parent=51 // pred_check_branch
          %880 = sbr.rel (%p878) target = $region56
        $region55: #{tpu_custom_call.1} parent=51 // pred_region
          %s881 = sand.u32 %s106, 1
          %s882 = scalar_lea.sflag [#allocation5], %s881
          %s883 = sand.u32 %s106, 1
          %s884 = smul.addr %s883, 64
          %s885 = scalar_lea.vmem [#allocation8], %s884
          %886 = dma.done %s882, 1024
        $region56: #{tpu_custom_call.1} parent=51 // pred_fallthru
          _
      $region52: #{tpu_custom_call.1} parent=5 // pred_fallthru
        _
    $region6: #{tpu_custom_call.1} parent=1 // loop_footer
      %s19 = sadd.s32 1, %s15
    $region7: #{tpu_custom_call.1} parent=1 // loop_footer_branch
      %14 = sbr.rel target = $region3
    $region8: #{tpu_custom_call.1} parent=1 // loop_exit
      _
    %887 = vsyncpa [#allocation4], 1
    %s888 = scalar_lea.sflag [#allocation4], 1
    %889 = vsyncpa %s888, 1
    %890 = vsyncpa [#allocation7], 1
    %s891 = scalar_lea.sflag [#allocation7], 1
    %892 = vsyncpa %s891, 1
    %893 = vsyncpa [#allocation5], 1
    %s894 = scalar_lea.sflag [#allocation5], 1
    %895 = vsyncpa %s894, 1

</llo_original>
